<compile_context>
chip_gen: v7x
topology: tpu7x:2x2x1
jax: 0.10.0
libtpu: 0.0.40
codegen_flags: <defaults>
</compile_context>

<pallas_src>
import jax
import jax.numpy as jnp
from jax.experimental import pallas as pl
from jax.experimental.pallas import tpu as pltpu


def _round_up(x, m):
    return ((x + m - 1) // m) * m


def _vmem_limit(step_bytes):
    # ~2x the per-step working set (double buffering) plus headroom, clamped
    # safely inside v7x's 64 MiB physical VMEM.
    return int(min(max(4 * step_bytes, 16 * 1024 * 1024), 48 * 1024 * 1024))


# ---------------------------------------------------------------------------
# Path 1: shared weight  —  mu[b, j] = sum_i z[b, i] * W[i, j]
# ---------------------------------------------------------------------------
def _zdec_shared_kernel(z_ref, w_ref, o_ref):
    # (tm, I) @ (I, tn) -> (tm, tn), f32 accumulation on the MXU.
    o_ref[...] = jnp.dot(
        z_ref[...], w_ref[...], preferred_element_type=jnp.float32
    ).astype(o_ref.dtype)


def zdecoder_shared(z, weight, *, tm=None, tn=None):
    B, I = z.shape
    I2, J = weight.shape
    assert I2 == I
    out_dtype = jnp.promote_types(z.dtype, weight.dtype)
    itemsize = jnp.dtype(out_dtype).itemsize
    budget = 16 * 1024 * 1024  # target for the double-buffered working set

    if tm is None:
        # Row tile: sublane-aligned; capped at MXU-friendly 256.
        tm = min(_round_up(B, 8), 256)
    if tn is None:
        # Column tile: lane-dense multiple of 128 (unmasked output stores),
        # as large as the VMEM budget allows given I and tm.
        words = budget // (2 * itemsize)          # double buffering
        tn_cap = max(words - tm * I, 0) // max(I + tm, 1)
        tn_cap = max(128, (tn_cap // 128) * 128)
        tn = max(128, min(_round_up(J, 128), tn_cap, 1024))

    grid = (pl.cdiv(B, tm), pl.cdiv(J, tn))
    step_bytes = (tm * I + I * tn + tm * tn) * itemsize
    return pl.pallas_call(
        _zdec_shared_kernel,
        out_shape=jax.ShapeDtypeStruct((B, J), out_dtype),
        grid_spec=pltpu.PrefetchScalarGridSpec(
            num_scalar_prefetch=0,
            grid=grid,
            in_specs=[
                pl.BlockSpec((tm, I), lambda i, j: (i, 0)),
                pl.BlockSpec((I, tn), lambda i, j: (0, j)),
            ],
            out_specs=pl.BlockSpec((tm, tn), lambda i, j: (i, j)),
        ),
        compiler_params=pltpu.CompilerParams(
            dimension_semantics=("parallel", "parallel"),
            vmem_limit_bytes=_vmem_limit(step_bytes),
        ),
    )(z, weight)


# ---------------------------------------------------------------------------
# Path 2: per-batch weight + delta
#   mu[b, j] = sum_i z[b, i] * (W + D)[b, i, j]
# Grid over (batch tiles, column tiles); (W + D) is never materialized.
# ---------------------------------------------------------------------------
def _zdec_delta_kernel(z_ref, w_ref, d_ref, o_ref):
    # z_ref: (TB, I); w_ref/d_ref: (TB, I, TJ); o_ref: (TB, TJ)
    tb = o_ref.shape[0]
    for b in range(tb):                          # static unroll; TB <= 32
        zr = z_ref[b:b + 1, :]                   # (1, I)
        mu = jnp.dot(zr, w_ref[b], preferred_element_type=jnp.float32)
        mu = mu + jnp.dot(zr, d_ref[b], preferred_element_type=jnp.float32)
        o_ref[b:b + 1, :] = mu.astype(o_ref.dtype)


def zdecoder_delta(z, weight, delta, *, tb=None, tj=None):
    B, I = z.shape
    Bw, I2, J = weight.shape
    assert Bw == B and I2 == I and delta.shape == weight.shape
    out_dtype = jnp.promote_types(
        z.dtype, jnp.promote_types(weight.dtype, delta.dtype)
    )
    itemsize = jnp.dtype(weight.dtype).itemsize
    budget = 16 * 1024 * 1024  # W+D, double-buffered, per grid step

    if tj is None:
        # Lane-dense column tile, sized assuming the minimum TB of 8.
        tj_cap = budget // max(2 * 2 * 8 * I * itemsize, 1)
        tj = min(_round_up(J, 128), max(128, (tj_cap // 128) * 128), 2048)
    if tb is None:
        # Batch-row tile: multiple of 8; bounded so the static unroll stays
        # small and the double-buffered (W, D) slab stays under budget.
        per_tb = 2 * 2 * I * tj * itemsize
        tb = max(8, min(_round_up(B, 8), (budget // per_tb) // 8 * 8, 32))

    grid = (pl.cdiv(B, tb), pl.cdiv(J, tj))
    step_bytes = (tb * I + 2 * tb * I * tj + tb * tj) * itemsize
    return pl.pallas_call(
        _zdec_delta_kernel,
        out_shape=jax.ShapeDtypeStruct((B, J), out_dtype),
        grid_spec=pltpu.PrefetchScalarGridSpec(
            num_scalar_prefetch=0,
            grid=grid,
            in_specs=[
                pl.BlockSpec((tb, I), lambda b, j: (b, 0)),
                pl.BlockSpec((tb, I, tj), lambda b, j: (b, 0, j)),
                pl.BlockSpec((tb, I, tj), lambda b, j: (b, 0, j)),
            ],
            out_specs=pl.BlockSpec((tb, tj), lambda b, j: (b, j)),
        ),
        compiler_params=pltpu.CompilerParams(
            dimension_semantics=("parallel", "parallel"),
            vmem_limit_bytes=_vmem_limit(step_bytes),
        ),
    )(z, weight, delta)


def zdecoder_forward(z, weight, delta=None):
    """Pallas equivalent of ZDecoder.forward."""
    if delta is None:
        return zdecoder_shared(z, weight)
    return zdecoder_delta(z, weight, delta)


if __name__ == "__main__":
    # Module-consistent small shapes: batch=8, num_latent=32, num_var=128.
    B, I, J = 8, 32, 128

    key = jax.random.PRNGKey(0)
    kz, kw, kwb, kd = jax.random.split(key, 4)

    z = jax.random.normal(kz, (B, I), dtype=jnp.float32)
    weight_shared = jax.random.normal(kw, (I, J), dtype=jnp.float32) * 0.1
    weight_batched = jax.random.normal(kwb, (B, I, J), dtype=jnp.float32) * 0.1
    delta = jax.random.normal(kd, (B, I, J), dtype=jnp.float32) * 0.01

    # Path 1: delta is None (shared weight matmul)
    mu1 = jax.block_until_ready(zdecoder_forward(z, weight_shared))
    ref1 = jnp.einsum("bi,ij->bj", z, weight_shared)
    assert mu1.shape == (B, J)
    assert jnp.allclose(mu1, ref1, atol=1e-4, rtol=1e-4)

    # Path 2: per-batch weight + delta
    mu2 = jax.block_until_ready(zdecoder_forward(z, weight_batched, delta))
    ref2 = jnp.einsum("bi,bij->bj", z, weight_batched + delta)
    assert mu2.shape == (B, J)
    assert jnp.allclose(mu2, ref2, atol=1e-4, rtol=1e-4)

    print("KERNEL_OK")
</pallas_src>

<mosaic_0001>
module attributes {stable_mosaic.version = 11 : i64} {
  func.func @_zdec_shared_kernel(%arg0: i32, %arg1: i32, %arg2: memref<8x32xf32, #tpu.memory_space<vmem>>, %arg3: memref<32x128xf32, #tpu.memory_space<vmem>>, %arg4: memref<8x128xf32, #tpu.memory_space<vmem>>) attributes {dimension_semantics = [#tpu.dimension_semantics<parallel>, #tpu.dimension_semantics<parallel>], iteration_bounds = array<i64: 1, 1>, scalar_prefetch = 0 : i64, scratch_operands = 0 : i64, tpu.core_type = #tpu.core_type<tc>, window_params = [{transform_indices = @transform_0, window_bounds = array<i64: 8, 32>}, {transform_indices = @transform_1, window_bounds = array<i64: 32, 128>}, {transform_indices = @transform_2, window_bounds = array<i64: 8, 128>}]} {
    %c0 = arith.constant 0 : index
    %c0_0 = arith.constant 0 : index
    %0 = vector.load %arg2[%c0, %c0_0] : memref<8x32xf32, #tpu.memory_space<vmem>>, vector<8x32xf32>
    %c0_1 = arith.constant 0 : index
    %c0_2 = arith.constant 0 : index
    %1 = vector.load %arg3[%c0_1, %c0_2] : memref<32x128xf32, #tpu.memory_space<vmem>>, vector<32x128xf32>
    %cst = arith.constant dense<0.000000e+00> : vector<8x128xf32>
    %2 = tpu.matmul %0, %1, %cst {dimension_numbers = #tpu.dot_dimension_numbers<[1], [0], [0], [1], [0, 0, 1, 1], [], []>} : vector<8x32xf32>, vector<32x128xf32>, vector<8x128xf32> -> vector<8x128xf32>
    %c0_3 = arith.constant 0 : index
    %c0_4 = arith.constant 0 : index
    %3 = vector.load %arg4[%c0_3, %c0_4] : memref<8x128xf32, #tpu.memory_space<vmem>>, vector<8x128xf32>
    tpu.vector_store %arg4[%c0_3, %c0_4], %2 {strides = array<i32>} : memref<8x128xf32, #tpu.memory_space<vmem>>, vector<8x128xf32>,
    return
  }
  func.func @transform_0(%arg0: i32, %arg1: i32) -> (i32, i32) {
    %c0_i32 = arith.constant 0 : i32
    %c0_i32_0 = arith.constant 0 : i32
    return %arg0, %c0_i32 : i32, i32
  }
  func.func @transform_1(%arg0: i32, %arg1: i32) -> (i32, i32) {
    %c0_i32 = arith.constant 0 : i32
    %c0_i32_0 = arith.constant 0 : i32
    return %c0_i32, %arg1 : i32, i32
  }
  func.func @transform_2(%arg0: i32, %arg1: i32) -> (i32, i32) {
    %c0_i32 = arith.constant 0 : i32
    return %arg0, %arg1 : i32, i32
  }
}

</mosaic_0001>

<llo_original>
// kernel: tpu_custom_call.1
$region0: #{tpu_custom_call.1}
  #allocation0 [shape = 'u32[]', space=smem, size = 0x4, offset = 0x4, fixed_abs, tag = 'smem constant byte address 0x4 - core index']
  #allocation1 [shape = 'u32[144,128]{1,0:T(1,128)}', space=vmem, size = 0x12000, scoped, tag = 'internal scratch']
  %s0 = inlined_call_operand.hbm [shape: f32[8,32], index: 0, kind: input, shape index: {}]
  %s1 = inlined_call_operand.hbm [shape: f32[32,128], index: 1, kind: input, shape index: {}]
  %s2 = inlined_call_operand.hbm [shape: f32[8,128], index: 2, kind: output, shape index: {}]
  %s3 = sld [smem:[#allocation0]]
  $region26: #{tpu_custom_call.1} parent=0
    _
  %s5 = ssub.s32 1, %s3
  %s6 = scalar_select 0, %s5, %s3
  $region1: #{tpu_custom_call.1} parent=0
    #allocation2 [shape = 'u8[4096]{0}', space=vmem, size = 0x1000, scoped, tag = 'input window, operand 0, single buffered']
    #allocation3 [shape = 's32[1]{0}', space=sflag, size = 0x4, scoped, tag = 'scoped memory for tpu_custom_call.1']
    #allocation4 [shape = 's32[1]{0}', space=sflag, size = 0x4, scoped, tag = 'scoped memory for tpu_custom_call.1']
    #allocation5 [shape = 'u8[16384]{0}', space=vmem, size = 0x4000, scoped, tag = 'input window, operand 1, single buffered']
    #allocation6 [shape = 's32[1]{0}', space=sflag, size = 0x4, scoped, tag = 'scoped memory for tpu_custom_call.1']
    #allocation7 [shape = 'u8[4096]{0}', space=vmem, size = 0x1000, scoped, tag = 'output window, operand 0, single buffered']
    %7 = vsyncpa [#allocation3], 0
    %8 = vsyncpa [#allocation6], 0
    %9 = vsyncpa [#allocation4], 0
    // Predicated region
    $region2: #{tpu_custom_call.1} parent=1 // pred_check
      _
    $region3: #{tpu_custom_call.1} parent=1 // pred_check_branch
      %11 = sbr.rel (0) target = $region5
    $region4: #{tpu_custom_call.1} parent=1 // pred_region
      %s13 = ssub.s32 128, 128
      %14 = vsyncadd [#allocation3], %s13
      %s16 = sshll.u32 [#allocation2], 4
      %s17 = int_to_ptr.vmem [resolvable:$true] %s16
      %19 = dma.hbm_to_vmem [thread:$0]  %s0, 128, %s17, [#allocation3]
    $region5: #{tpu_custom_call.1} parent=1 // pred_fallthru
      _
    // Predicated region
    $region6: #{tpu_custom_call.1} parent=1 // pred_check
      _
    $region7: #{tpu_custom_call.1} parent=1 // pred_check_branch
      %21 = sbr.rel (0) target = $region9
    $region8: #{tpu_custom_call.1} parent=1 // pred_region
      %s23 = ssub.s32 512, 512
      %24 = vsyncadd [#allocation6], %s23
      %s25 = sshll.u32 [#allocation5], 4
      %s26 = int_to_ptr.vmem [resolvable:$true] %s25
      %31 = dma.hbm_to_vmem [thread:$0]  %s1, 512, %s26, [#allocation6], 128, 128, 8
    $region9: #{tpu_custom_call.1} parent=1 // pred_fallthru
      _
    // Predicated region
    $region10: #{tpu_custom_call.1} parent=1 // pred_check
      _
    $region11: #{tpu_custom_call.1} parent=1 // pred_check_branch
      %33 = sbr.rel (0) target = $region13
    $region12: #{tpu_custom_call.1} parent=1 // pred_region
      %34 = dma.done [#allocation3], 128
    $region13: #{tpu_custom_call.1} parent=1 // pred_fallthru
      _
    // Predicated region
    $region14: #{tpu_custom_call.1} parent=1 // pred_check
      _
    $region15: #{tpu_custom_call.1} parent=1 // pred_check_branch
      %36 = sbr.rel (0) target = $region17
    $region16: #{tpu_custom_call.1} parent=1 // pred_region
      %37 = dma.done [#allocation6], 512
    $region17: #{tpu_custom_call.1} parent=1 // pred_fallthru
      _
    %v38 = vld [vmem:[#allocation2] sm:$0xff]
    %v39 = vld [vmem:[#allocation5] sm:$0xff]
    %v40 = vld [vmem:[#allocation5 + $0x8] sm:$0xff]
    %v41 = vld [vmem:[#allocation5 + $0x10] sm:$0xff]
    %v42 = vld [vmem:[#allocation5 + $0x18] sm:$0xff]
    %vm43 = vcmask 261120
    %v45 = vsel %vm43, %v38, 0
    %47 = vmatprep.subr.mxu0 0.0
    %48 = vmatpush1.msra.mxu0 %v39
    %49 = vmatprep.subr.mxu0 0.0
    %50 = vmatpush1.msra.mxu0 %v40
    %51 = vmatprep.subr.mxu0 0.0
    %52 = vmatpush1.msra.mxu0 %v41
    %53 = vmatprep.subr.mxu0 0.0
    %54 = vmatpush1.msra.mxu0 %v42
    %55 = vmatprep.subr.mxu0 0.0
    %56 = vmatpush1.msra.mxu0 0.0
    %57 = vmatprep.subr.mxu0 0.0
    %58 = vmatpush1.msra.mxu0 0.0
    %59 = vmatprep.subr.mxu0 0.0
    %60 = vmatpush1.msra.mxu0 0.0
    %61 = vmatprep.subr.mxu0 0.0
    %62 = vmatpush1.msra.mxu0 0.0
    %63 = vmatprep.subr.mxu0 0.0
    %64 = vmatpush1.msra.mxu0 0.0
    %65 = vmatprep.subr.mxu0 0.0
    %66 = vmatpush1.msra.mxu0 0.0
    %67 = vmatprep.subr.mxu0 0.0
    %68 = vmatpush1.msra.mxu0 0.0
    %69 = vmatprep.subr.mxu0 0.0
    %70 = vmatpush1.msra.mxu0 0.0
    %71 = vmatprep.subr.mxu0 0.0
    %72 = vmatpush1.msra.mxu0 0.0
    %73 = vmatprep.subr.mxu0 0.0
    %74 = vmatpush1.msra.mxu0 0.0
    %75 = vmatprep.subr.mxu0 0.0
    %76 = vmatpush1.msra.mxu0 0.0
    %77 = vmatprep.subr.mxu0 0.0
    %78 = vmatpush1.msra.mxu0 0.0
    %79 = vmatprep.subr.mxu0 0.0
    %80 = vmatpush1.msra.mxu0 0.0
    %81 = vmatprep.subr.mxu0 0.0
    %82 = vmatpush1.msra.mxu0 0.0
    %83 = vmatprep.subr.mxu0 0.0
    %84 = vmatpush1.msra.mxu0 0.0
    %85 = vmatprep.subr.mxu0 0.0
    %86 = vmatpush1.msra.mxu0 0.0
    %87 = vmatprep.subr.mxu0 0.0
    %88 = vmatpush1.msra.mxu0 0.0
    %89 = vmatprep.subr.mxu0 0.0
    %90 = vmatpush1.msra.mxu0 0.0
    %91 = vmatprep.subr.mxu0 0.0
    %92 = vmatpush1.msra.mxu0 0.0
    %93 = vmatprep.subr.mxu0 0.0
    %94 = vmatpush1.msra.mxu0 0.0
    %95 = vmatprep.subr.mxu0 0.0
    %96 = vmatpush1.msra.mxu0 0.0
    %97 = vmatprep.subr.mxu0 0.0
    %98 = vmatpush1.msra.mxu0 0.0
    %99 = vmatprep.subr.mxu0 0.0
    %100 = vmatpush1.msra.mxu0 0.0
    %101 = vmatprep.subr.mxu0 0.0
    %102 = vmatpush1.msra.mxu0 0.0
    %103 = vmatprep.subr.mxu0 0.0
    %104 = vmatpush1.msra.mxu0 0.0
    %105 = vmatprep.subr.mxu0 0.0
    %106 = vmatpush1.msra.mxu0 0.0
    %107 = vmatprep.subr.mxu0 0.0
    %108 = vmatpush1.msra.mxu0 0.0
    %109 = vmatprep.subr.mxu0 0.0
    %110 = vmatpush1.msra.mxu0 0.0
    %111 = vmatprep.mubr.f32.mxu0 0.0
    %112 = vmatmul.mubr.f32.gmra.mrb[0].mxu0 %v45
    %v113 = vpop.f32.mrb[0].mxu0
    %v114 = vadd.f32 0.0, %v113
    %v115 = vpop.f32.mrb[0].mxu0
    %116 = vdwg.mxu0
    %117 = vst [vmem:[#allocation7] sm:$0xff] %v114
    // Predicated region
    $region18: #{tpu_custom_call.1} parent=1 // pred_check
      _
    $region19: #{tpu_custom_call.1} parent=1 // pred_check_branch
      %119 = sbr.rel (0) target = $region21
    $region20: #{tpu_custom_call.1} parent=1 // pred_region
      %s121 = ssub.s32 128, 128
      %122 = vsyncadd [#allocation4], %s121
      %s124 = sshll.u32 [#allocation7], 4
      %s125 = int_to_ptr.vmem [resolvable:$true] %s124
      %127 = dma.vmem_to_hbm [thread:$0]  %s125, 128, %s2, [#allocation4]
    $region21: #{tpu_custom_call.1} parent=1 // pred_fallthru
      _
    // Predicated region
    $region22: #{tpu_custom_call.1} parent=1 // pred_check
      _
    $region23: #{tpu_custom_call.1} parent=1 // pred_check_branch
      %129 = sbr.rel (0) target = $region25
    $region24: #{tpu_custom_call.1} parent=1 // pred_region
      %130 = dma.done [#allocation4], 128
    $region25: #{tpu_custom_call.1} parent=1 // pred_fallthru
      _
    %131 = vsyncpa [#allocation3], 1
    %132 = vsyncpa [#allocation6], 1
    %133 = vsyncpa [#allocation4], 1

</llo_original>
